<compile_context>
chip_gen: v5e
topology: v5e:2x2
jax: 0.10.0
libtpu: 0.0.40
codegen_flags: <defaults>
</compile_context>

<pallas_src>
import jax
import jax.numpy as jnp
from jax.experimental import pallas as pl
from jax.experimental.pallas import tpu as pltpu

_BN_EPS = 1e-5


def _momoe_kernel(
    x_ref, xh_ref, xr_ref, xc_ref,
    w1h_ref, b1h_ref, w2h_ref, b2h_ref, w3h_ref,
    w1r_ref, b1r_ref, w2r_ref, b2r_ref, w3r_ref,
    w1c_ref, b1c_ref, w2c_ref, b2c_ref, w3c_ref,
    wg1_ref, bg1_ref, wg2_ref,
    b3_ref, bg2_ref,                      # SMEM scalars: (3,) each
    o_ref,
):
    f32 = jnp.float32

    def expert(xe_ref, w1_ref, b1_ref, w2_ref, b2_ref, w3_ref, b3):
        xe = xe_ref[...].astype(f32)
        # Linear -> (BN folded) -> ReLU -> (Dropout = id)
        h = jnp.dot(xe, w1_ref[...], preferred_element_type=f32) + b1_ref[...]
        h = jnp.maximum(h, 0.0)
        h = jnp.dot(h, w2_ref[...], preferred_element_type=f32) + b2_ref[...]
        h = jnp.maximum(h, 0.0)
        # Final Linear(hidden, 1): VPU mul + lane reduce (no 1-lane-wide MXU matmul).
        return jnp.sum(h * w3_ref[...], axis=-1, keepdims=True) + b3      # (B, 1)

    s_h = expert(xh_ref, w1h_ref, b1h_ref, w2h_ref, b2h_ref, w3h_ref, b3_ref[0])
    s_r = expert(xr_ref, w1r_ref, b1r_ref, w2r_ref, b2r_ref, w3r_ref, b3_ref[1])
    s_c = expert(xc_ref, w1c_ref, b1c_ref, w2c_ref, b2c_ref, w3c_ref, b3_ref[2])

    # Gating net: Linear(full, 64) -> ReLU -> Linear(64, 3) -> softmax(dim=1).
    x = x_ref[...].astype(f32)
    hg = jnp.dot(x, wg1_ref[...], preferred_element_type=f32) + bg1_ref[...]
    hg = jnp.maximum(hg, 0.0)                                             # (B, 64)
    # Width-3 gate head as three mul + lane-reduce ops (wg2 passed as (3, 64)).
    l0 = jnp.sum(hg * wg2_ref[0:1, :], axis=-1, keepdims=True) + bg2_ref[0]
    l1 = jnp.sum(hg * wg2_ref[1:2, :], axis=-1, keepdims=True) + bg2_ref[1]
    l2 = jnp.sum(hg * wg2_ref[2:3, :], axis=-1, keepdims=True) + bg2_ref[2]
    # Numerically-stable softmax over the 3 experts, kept on (B,1) vregs.
    m = jnp.maximum(jnp.maximum(l0, l1), l2)
    e0 = jnp.exp(l0 - m)
    e1 = jnp.exp(l1 - m)
    e2 = jnp.exp(l2 - m)
    mix = (s_h * e0 + s_r * e1 + s_c * e2) / (e0 + e1 + e2)               # (B, 1)
    o_ref[...] = mix.astype(o_ref.dtype)


def _fold_bn_into_linear(w, b, gamma, beta, mean, var, eps=_BN_EPS):
    """Fold eval-mode BatchNorm1d into the preceding Linear (convention: x @ w + b)."""
    scale = gamma / jnp.sqrt(var + eps)
    return w * scale[None, :], (b - mean) * scale + beta


def momoe_deepsurv_forward(x, params, splits):
    """x: (B, full_dim) float32. Returns (B, 1) mixture-of-experts risk score."""
    h_dim, r_dim, c_dim = splits
    n, full_dim = x.shape
    xh = x[:, :h_dim]
    xr = x[:, h_dim:h_dim + r_dim]
    xc = x[:, full_dim - c_dim:]

    flat = []
    b3 = []
    for p in params["experts"]:
        w1, b1 = _fold_bn_into_linear(p["w1"], p["b1"], p["g1"], p["be1"], p["m1"], p["v1"])
        w2, b2 = _fold_bn_into_linear(p["w2"], p["b2"], p["g2"], p["be2"], p["m2"], p["v2"])
        flat += [w1, b1[None, :], w2, b2[None, :], p["w3"][None, :]]
        b3.append(p["b3"])
    g = params["gate"]
    flat += [g["w1"], g["b1"][None, :], g["w2"].T]           # gate head weights as (3, 64)
    b3_all = jnp.stack(b3).astype(jnp.float32)               # (3,) expert-head biases (SMEM)
    bg2 = g["b2"].astype(jnp.float32)                        # (3,) gate-head biases  (SMEM)

    vmem = pl.BlockSpec(memory_space=pltpu.MemorySpace.VMEM)
    smem = pl.BlockSpec(memory_space=pltpu.MemorySpace.SMEM)
    out = pl.pallas_call(
        _momoe_kernel,
        out_shape=jax.ShapeDtypeStruct((n, 1), x.dtype),
        in_specs=[vmem] * (4 + len(flat)) + [smem, smem],
        out_specs=vmem,
    )(x, xh, xr, xc, *flat, b3_all, bg2)
    return out


def _reference(x, params, splits):
    """Pure-JAX eval-mode reference (BN applied explicitly, un-folded)."""
    h_dim, r_dim, c_dim = splits
    full_dim = x.shape[1]
    inputs = [x[:, :h_dim], x[:, h_dim:h_dim + r_dim], x[:, full_dim - c_dim:]]
    scores = []
    for p, xe in zip(params["experts"], inputs):
        h = xe @ p["w1"] + p["b1"]
        h = (h - p["m1"]) / jnp.sqrt(p["v1"] + _BN_EPS) * p["g1"] + p["be1"]
        h = jnp.maximum(h, 0.0)
        h = h @ p["w2"] + p["b2"]
        h = (h - p["m2"]) / jnp.sqrt(p["v2"] + _BN_EPS) * p["g2"] + p["be2"]
        h = jnp.maximum(h, 0.0)
        scores.append(h @ p["w3"] + p["b3"])                  # (B,)
    scores = jnp.stack(scores, axis=1)                        # (B, 3)
    g = params["gate"]
    hg = jnp.maximum(x @ g["w1"] + g["b1"], 0.0)
    gate_w = jax.nn.softmax(hg @ g["w2"] + g["b2"], axis=1)   # (B, 3)
    return jnp.sum(scores * gate_w, axis=1, keepdims=True)    # (B, 1)


def _make_params(key, splits, hidden, full_dim, gate_hidden=64):
    ek, gk = jax.random.split(key)
    expert_keys = jax.random.split(ek, len(splits))
    experts = []
    for kk, in_dim in zip(expert_keys, splits):
        ks = jax.random.split(kk, 14)
        experts.append(dict(
            w1=jax.random.normal(ks[0], (in_dim, hidden), jnp.float32) / in_dim ** 0.5,
            b1=0.02 * jax.random.normal(ks[1], (hidden,), jnp.float32),
            g1=1.0 + 0.1 * jax.random.normal(ks[2], (hidden,), jnp.float32),
            be1=0.02 * jax.random.normal(ks[3], (hidden,), jnp.float32),
            m1=0.05 * jax.random.normal(ks[4], (hidden,), jnp.float32),
            v1=0.5 + jax.random.uniform(ks[5], (hidden,), jnp.float32),
            w2=jax.random.normal(ks[6], (hidden, hidden), jnp.float32) / hidden ** 0.5,
            b2=0.02 * jax.random.normal(ks[7], (hidden,), jnp.float32),
            g2=1.0 + 0.1 * jax.random.normal(ks[8], (hidden,), jnp.float32),
            be2=0.02 * jax.random.normal(ks[9], (hidden,), jnp.float32),
            m2=0.05 * jax.random.normal(ks[10], (hidden,), jnp.float32),
            v2=0.5 + jax.random.uniform(ks[11], (hidden,), jnp.float32),
            w3=jax.random.normal(ks[12], (hidden,), jnp.float32) / hidden ** 0.5,
            b3=0.02 * jax.random.normal(ks[13], (), jnp.float32),
        ))
    gks = jax.random.split(gk, 4)
    gate = dict(
        w1=jax.random.normal(gks[0], (full_dim, gate_hidden), jnp.float32) / full_dim ** 0.5,
        b1=0.02 * jax.random.normal(gks[1], (gate_hidden,), jnp.float32),
        w2=jax.random.normal(gks[2], (gate_hidden, len(splits)), jnp.float32) / gate_hidden ** 0.5,
        b2=0.02 * jax.random.normal(gks[3], (len(splits),), jnp.float32),
    )
    return dict(experts=experts, gate=gate)


if __name__ == "__main__":
    SPLITS = (16, 24, 8)          # (hist, rna, clin) feature widths
    FULL_DIM = sum(SPLITS)
    HIDDEN = 32                   # small test size (module default is 224)
    BATCH = 8

    key = jax.random.PRNGKey(0)
    kx, kp = jax.random.split(key)
    x = jax.random.normal(kx, (BATCH, FULL_DIM), dtype=jnp.float32)
    params = _make_params(kp, SPLITS, HIDDEN, FULL_DIM)

    out = momoe_deepsurv_forward(x, params, SPLITS)
    out = jax.block_until_ready(out)

    ref = _reference(x, params, SPLITS)
    assert out.shape == (BATCH, 1), out.shape
    assert jnp.allclose(out, ref, atol=1e-4, rtol=1e-4), (out, ref)

    print("KERNEL_OK")
</pallas_src>

<mosaic_0001>
module attributes {stable_mosaic.version = 11 : i64} {
  func.func @_momoe_kernel(%arg0: memref<8x48xf32, #tpu.memory_space<vmem>>, %arg1: memref<8x16xf32, #tpu.memory_space<vmem>>, %arg2: memref<8x24xf32, #tpu.memory_space<vmem>>, %arg3: memref<8x8xf32, #tpu.memory_space<vmem>>, %arg4: memref<16x32xf32, #tpu.memory_space<vmem>>, %arg5: memref<1x32xf32, #tpu.memory_space<vmem>>, %arg6: memref<32x32xf32, #tpu.memory_space<vmem>>, %arg7: memref<1x32xf32, #tpu.memory_space<vmem>>, %arg8: memref<1x32xf32, #tpu.memory_space<vmem>>, %arg9: memref<24x32xf32, #tpu.memory_space<vmem>>, %arg10: memref<1x32xf32, #tpu.memory_space<vmem>>, %arg11: memref<32x32xf32, #tpu.memory_space<vmem>>, %arg12: memref<1x32xf32, #tpu.memory_space<vmem>>, %arg13: memref<1x32xf32, #tpu.memory_space<vmem>>, %arg14: memref<8x32xf32, #tpu.memory_space<vmem>>, %arg15: memref<1x32xf32, #tpu.memory_space<vmem>>, %arg16: memref<32x32xf32, #tpu.memory_space<vmem>>, %arg17: memref<1x32xf32, #tpu.memory_space<vmem>>, %arg18: memref<1x32xf32, #tpu.memory_space<vmem>>, %arg19: memref<48x64xf32, #tpu.memory_space<vmem>>, %arg20: memref<1x64xf32, #tpu.memory_space<vmem>>, %arg21: memref<3x64xf32, #tpu.memory_space<vmem>>, %arg22: memref<3xf32, #tpu.memory_space<smem>>, %arg23: memref<3xf32, #tpu.memory_space<smem>>, %arg24: memref<8x1xf32, #tpu.memory_space<vmem>>) attributes {dimension_semantics = [], scalar_prefetch = 0 : i64, scratch_operands = 0 : i64, tpu.core_type = #tpu.core_type<tc>} {
    %c0 = arith.constant 0 : index
    %0 = memref.load %arg22[%c0] : memref<3xf32, #tpu.memory_space<smem>>
    %c0_0 = arith.constant 0 : index
    %c0_1 = arith.constant 0 : index
    %1 = vector.load %arg1[%c0_0, %c0_1] : memref<8x16xf32, #tpu.memory_space<vmem>>, vector<8x16xf32>
    %c0_2 = arith.constant 0 : index
    %c0_3 = arith.constant 0 : index
    %2 = vector.load %arg4[%c0_2, %c0_3] : memref<16x32xf32, #tpu.memory_space<vmem>>, vector<16x32xf32>
    %cst = arith.constant dense<0.000000e+00> : vector<8x32xf32>
    %3 = tpu.matmul %1, %2, %cst {dimension_numbers = #tpu.dot_dimension_numbers<[1], [0], [0], [1], [0, 0, 1, 1], [], []>} : vector<8x16xf32>, vector<16x32xf32>, vector<8x32xf32> -> vector<8x32xf32>
    %c0_4 = arith.constant 0 : index
    %c0_5 = arith.constant 0 : index
    %4 = vector.load %arg5[%c0_4, %c0_5] : memref<1x32xf32, #tpu.memory_space<vmem>>, vector<1x32xf32>
    %5 = vector.broadcast %4 : vector<1x32xf32> to vector<8x32xf32>
    %6 = arith.addf %3, %5 : vector<8x32xf32>
    %cst_6 = arith.constant 0.000000e+00 : f32
    %7 = vector.broadcast %cst_6 : f32 to vector<8x32xf32>
    %8 = arith.maximumf %6, %7 : vector<8x32xf32>
    %c0_7 = arith.constant 0 : index
    %c0_8 = arith.constant 0 : index
    %9 = vector.load %arg6[%c0_7, %c0_8] : memref<32x32xf32, #tpu.memory_space<vmem>>, vector<32x32xf32>
    %cst_9 = arith.constant dense<0.000000e+00> : vector<8x32xf32>
    %10 = tpu.matmul %8, %9, %cst_9 {dimension_numbers = #tpu.dot_dimension_numbers<[1], [0], [0], [1], [0, 0, 1, 1], [], []>} : vector<8x32xf32>, vector<32x32xf32>, vector<8x32xf32> -> vector<8x32xf32>
    %c0_10 = arith.constant 0 : index
    %c0_11 = arith.constant 0 : index
    %11 = vector.load %arg7[%c0_10, %c0_11] : memref<1x32xf32, #tpu.memory_space<vmem>>, vector<1x32xf32>
    %12 = vector.broadcast %11 : vector<1x32xf32> to vector<8x32xf32>
    %13 = arith.addf %10, %12 : vector<8x32xf32>
    %cst_12 = arith.constant 0.000000e+00 : f32
    %14 = vector.broadcast %cst_12 : f32 to vector<8x32xf32>
    %15 = arith.maximumf %13, %14 : vector<8x32xf32>
    %c0_13 = arith.constant 0 : index
    %c0_14 = arith.constant 0 : index
    %16 = vector.load %arg8[%c0_13, %c0_14] : memref<1x32xf32, #tpu.memory_space<vmem>>, vector<1x32xf32>
    %17 = vector.broadcast %16 : vector<1x32xf32> to vector<8x32xf32>
    %18 = arith.mulf %15, %17 : vector<8x32xf32>
    %cst_15 = arith.constant dense<0.000000e+00> : vector<8xf32>
    %19 = vector.multi_reduction <add>, %18, %cst_15 [1] : vector<8x32xf32> to vector<8xf32>
    %20 = vector.shape_cast %19 : vector<8xf32> to vector<8x1xf32>
    %21 = vector.broadcast %0 : f32 to vector<8x1xf32>
    %22 = arith.addf %20, %21 : vector<8x1xf32>
    %c1 = arith.constant 1 : index
    %23 = memref.load %arg22[%c1] : memref<3xf32, #tpu.memory_space<smem>>
    %c0_16 = arith.constant 0 : index
    %c0_17 = arith.constant 0 : index
    %24 = vector.load %arg2[%c0_16, %c0_17] : memref<8x24xf32, #tpu.memory_space<vmem>>, vector<8x24xf32>
    %c0_18 = arith.constant 0 : index
    %c0_19 = arith.constant 0 : index
    %25 = vector.load %arg9[%c0_18, %c0_19] : memref<24x32xf32, #tpu.memory_space<vmem>>, vector<24x32xf32>
    %cst_20 = arith.constant dense<0.000000e+00> : vector<8x32xf32>
    %26 = tpu.matmul %24, %25, %cst_20 {dimension_numbers = #tpu.dot_dimension_numbers<[1], [0], [0], [1], [0, 0, 1, 1], [], []>} : vector<8x24xf32>, vector<24x32xf32>, vector<8x32xf32> -> vector<8x32xf32>
    %c0_21 = arith.constant 0 : index
    %c0_22 = arith.constant 0 : index
    %27 = vector.load %arg10[%c0_21, %c0_22] : memref<1x32xf32, #tpu.memory_space<vmem>>, vector<1x32xf32>
    %28 = vector.broadcast %27 : vector<1x32xf32> to vector<8x32xf32>
    %29 = arith.addf %26, %28 : vector<8x32xf32>
    %cst_23 = arith.constant 0.000000e+00 : f32
    %30 = vector.broadcast %cst_23 : f32 to vector<8x32xf32>
    %31 = arith.maximumf %29, %30 : vector<8x32xf32>
    %c0_24 = arith.constant 0 : index
    %c0_25 = arith.constant 0 : index
    %32 = vector.load %arg11[%c0_24, %c0_25] : memref<32x32xf32, #tpu.memory_space<vmem>>, vector<32x32xf32>
    %cst_26 = arith.constant dense<0.000000e+00> : vector<8x32xf32>
    %33 = tpu.matmul %31, %32, %cst_26 {dimension_numbers = #tpu.dot_dimension_numbers<[1], [0], [0], [1], [0, 0, 1, 1], [], []>} : vector<8x32xf32>, vector<32x32xf32>, vector<8x32xf32> -> vector<8x32xf32>
    %c0_27 = arith.constant 0 : index
    %c0_28 = arith.constant 0 : index
    %34 = vector.load %arg12[%c0_27, %c0_28] : memref<1x32xf32, #tpu.memory_space<vmem>>, vector<1x32xf32>
    %35 = vector.broadcast %34 : vector<1x32xf32> to vector<8x32xf32>
    %36 = arith.addf %33, %35 : vector<8x32xf32>
    %cst_29 = arith.constant 0.000000e+00 : f32
    %37 = vector.broadcast %cst_29 : f32 to vector<8x32xf32>
    %38 = arith.maximumf %36, %37 : vector<8x32xf32>
    %c0_30 = arith.constant 0 : index
    %c0_31 = arith.constant 0 : index
    %39 = vector.load %arg13[%c0_30, %c0_31] : memref<1x32xf32, #tpu.memory_space<vmem>>, vector<1x32xf32>
    %40 = vector.broadcast %39 : vector<1x32xf32> to vector<8x32xf32>
    %41 = arith.mulf %38, %40 : vector<8x32xf32>
    %cst_32 = arith.constant dense<0.000000e+00> : vector<8xf32>
    %42 = vector.multi_reduction <add>, %41, %cst_32 [1] : vector<8x32xf32> to vector<8xf32>
    %43 = vector.shape_cast %42 : vector<8xf32> to vector<8x1xf32>
    %44 = vector.broadcast %23 : f32 to vector<8x1xf32>
    %45 = arith.addf %43, %44 : vector<8x1xf32>
    %c2 = arith.constant 2 : index
    %46 = memref.load %arg22[%c2] : memref<3xf32, #tpu.memory_space<smem>>
    %c0_33 = arith.constant 0 : index
    %c0_34 = arith.constant 0 : index
    %47 = vector.load %arg3[%c0_33, %c0_34] : memref<8x8xf32, #tpu.memory_space<vmem>>, vector<8x8xf32>
    %c0_35 = arith.constant 0 : index
    %c0_36 = arith.constant 0 : index
    %48 = vector.load %arg14[%c0_35, %c0_36] : memref<8x32xf32, #tpu.memory_space<vmem>>, vector<8x32xf32>
    %cst_37 = arith.constant dense<0.000000e+00> : vector<8x32xf32>
    %49 = tpu.matmul %47, %48, %cst_37 {dimension_numbers = #tpu.dot_dimension_numbers<[1], [0], [0], [1], [0, 0, 1, 1], [], []>} : vector<8x8xf32>, vector<8x32xf32>, vector<8x32xf32> -> vector<8x32xf32>
    %c0_38 = arith.constant 0 : index
    %c0_39 = arith.constant 0 : index
    %50 = vector.load %arg15[%c0_38, %c0_39] : memref<1x32xf32, #tpu.memory_space<vmem>>, vector<1x32xf32>
    %51 = vector.broadcast %50 : vector<1x32xf32> to vector<8x32xf32>
    %52 = arith.addf %49, %51 : vector<8x32xf32>
    %cst_40 = arith.constant 0.000000e+00 : f32
    %53 = vector.broadcast %cst_40 : f32 to vector<8x32xf32>
    %54 = arith.maximumf %52, %53 : vector<8x32xf32>
    %c0_41 = arith.constant 0 : index
    %c0_42 = arith.constant 0 : index
    %55 = vector.load %arg16[%c0_41, %c0_42] : memref<32x32xf32, #tpu.memory_space<vmem>>, vector<32x32xf32>
    %cst_43 = arith.constant dense<0.000000e+00> : vector<8x32xf32>
    %56 = tpu.matmul %54, %55, %cst_43 {dimension_numbers = #tpu.dot_dimension_numbers<[1], [0], [0], [1], [0, 0, 1, 1], [], []>} : vector<8x32xf32>, vector<32x32xf32>, vector<8x32xf32> -> vector<8x32xf32>
    %c0_44 = arith.constant 0 : index
    %c0_45 = arith.constant 0 : index
    %57 = vector.load %arg17[%c0_44, %c0_45] : memref<1x32xf32, #tpu.memory_space<vmem>>, vector<1x32xf32>
    %58 = vector.broadcast %57 : vector<1x32xf32> to vector<8x32xf32>
    %59 = arith.addf %56, %58 : vector<8x32xf32>
    %cst_46 = arith.constant 0.000000e+00 : f32
    %60 = vector.broadcast %cst_46 : f32 to vector<8x32xf32>
    %61 = arith.maximumf %59, %60 : vector<8x32xf32>
    %c0_47 = arith.constant 0 : index
    %c0_48 = arith.constant 0 : index
    %62 = vector.load %arg18[%c0_47, %c0_48] : memref<1x32xf32, #tpu.memory_space<vmem>>, vector<1x32xf32>
    %63 = vector.broadcast %62 : vector<1x32xf32> to vector<8x32xf32>
    %64 = arith.mulf %61, %63 : vector<8x32xf32>
    %cst_49 = arith.constant dense<0.000000e+00> : vector<8xf32>
    %65 = vector.multi_reduction <add>, %64, %cst_49 [1] : vector<8x32xf32> to vector<8xf32>
    %66 = vector.shape_cast %65 : vector<8xf32> to vector<8x1xf32>
    %67 = vector.broadcast %46 : f32 to vector<8x1xf32>
    %68 = arith.addf %66, %67 : vector<8x1xf32>
    %c0_50 = arith.constant 0 : index
    %c0_51 = arith.constant 0 : index
    %69 = vector.load %arg0[%c0_50, %c0_51] : memref<8x48xf32, #tpu.memory_space<vmem>>, vector<8x48xf32>
    %c0_52 = arith.constant 0 : index
    %c0_53 = arith.constant 0 : index
    %70 = vector.load %arg19[%c0_52, %c0_53] : memref<48x64xf32, #tpu.memory_space<vmem>>, vector<48x64xf32>
    %cst_54 = arith.constant dense<0.000000e+00> : vector<8x64xf32>
    %71 = tpu.matmul %69, %70, %cst_54 {dimension_numbers = #tpu.dot_dimension_numbers<[1], [0], [0], [1], [0, 0, 1, 1], [], []>} : vector<8x48xf32>, vector<48x64xf32>, vector<8x64xf32> -> vector<8x64xf32>
    %c0_55 = arith.constant 0 : index
    %c0_56 = arith.constant 0 : index
    %72 = vector.load %arg20[%c0_55, %c0_56] : memref<1x64xf32, #tpu.memory_space<vmem>>, vector<1x64xf32>
    %73 = vector.broadcast %72 : vector<1x64xf32> to vector<8x64xf32>
    %74 = arith.addf %71, %73 : vector<8x64xf32>
    %cst_57 = arith.constant 0.000000e+00 : f32
    %75 = vector.broadcast %cst_57 : f32 to vector<8x64xf32>
    %76 = arith.maximumf %74, %75 : vector<8x64xf32>
    %c0_58 = arith.constant 0 : index
    %c0_59 = arith.constant 0 : index
    %77 = vector.load %arg21[%c0_58, %c0_59] : memref<3x64xf32, #tpu.memory_space<vmem>>, vector<1x64xf32>
    %78 = vector.broadcast %77 : vector<1x64xf32> to vector<8x64xf32>
    %79 = arith.mulf %76, %78 : vector<8x64xf32>
    %cst_60 = arith.constant dense<0.000000e+00> : vector<8xf32>
    %80 = vector.multi_reduction <add>, %79, %cst_60 [1] : vector<8x64xf32> to vector<8xf32>
    %81 = vector.shape_cast %80 : vector<8xf32> to vector<8x1xf32>
    %c0_61 = arith.constant 0 : index
    %82 = memref.load %arg23[%c0_61] : memref<3xf32, #tpu.memory_space<smem>>
    %83 = vector.broadcast %82 : f32 to vector<8x1xf32>
    %84 = arith.addf %81, %83 : vector<8x1xf32>
    %c1_62 = arith.constant 1 : index
    %c0_63 = arith.constant 0 : index
    %85 = vector.load %arg21[%c1_62, %c0_63] : memref<3x64xf32, #tpu.memory_space<vmem>>, vector<1x64xf32>
    %86 = vector.broadcast %85 : vector<1x64xf32> to vector<8x64xf32>
    %87 = arith.mulf %76, %86 : vector<8x64xf32>
    %cst_64 = arith.constant dense<0.000000e+00> : vector<8xf32>
    %88 = vector.multi_reduction <add>, %87, %cst_64 [1] : vector<8x64xf32> to vector<8xf32>
    %89 = vector.shape_cast %88 : vector<8xf32> to vector<8x1xf32>
    %c1_65 = arith.constant 1 : index
    %90 = memref.load %arg23[%c1_65] : memref<3xf32, #tpu.memory_space<smem>>
    %91 = vector.broadcast %90 : f32 to vector<8x1xf32>
    %92 = arith.addf %89, %91 : vector<8x1xf32>
    %c2_66 = arith.constant 2 : index
    %c0_67 = arith.constant 0 : index
    %93 = vector.load %arg21[%c2_66, %c0_67] : memref<3x64xf32, #tpu.memory_space<vmem>>, vector<1x64xf32>
    %94 = vector.broadcast %93 : vector<1x64xf32> to vector<8x64xf32>
    %95 = arith.mulf %76, %94 : vector<8x64xf32>
    %cst_68 = arith.constant dense<0.000000e+00> : vector<8xf32>
    %96 = vector.multi_reduction <add>, %95, %cst_68 [1] : vector<8x64xf32> to vector<8xf32>
    %97 = vector.shape_cast %96 : vector<8xf32> to vector<8x1xf32>
    %c2_69 = arith.constant 2 : index
    %98 = memref.load %arg23[%c2_69] : memref<3xf32, #tpu.memory_space<smem>>
    %99 = vector.broadcast %98 : f32 to vector<8x1xf32>
    %100 = arith.addf %97, %99 : vector<8x1xf32>
    %101 = arith.maximumf %84, %92 : vector<8x1xf32>
    %102 = arith.maximumf %101, %100 : vector<8x1xf32>
    %103 = arith.subf %84, %102 : vector<8x1xf32>
    %104 = math.exp %103 : vector<8x1xf32>
    %105 = arith.subf %92, %102 : vector<8x1xf32>
    %106 = math.exp %105 : vector<8x1xf32>
    %107 = arith.subf %100, %102 : vector<8x1xf32>
    %108 = math.exp %107 : vector<8x1xf32>
    %109 = arith.mulf %22, %104 : vector<8x1xf32>
    %110 = arith.mulf %45, %106 : vector<8x1xf32>
    %111 = arith.addf %109, %110 : vector<8x1xf32>
    %112 = arith.mulf %68, %108 : vector<8x1xf32>
    %113 = arith.addf %111, %112 : vector<8x1xf32>
    %114 = arith.addf %104, %106 : vector<8x1xf32>
    %115 = arith.addf %114, %108 : vector<8x1xf32>
    %116 = arith.divf %113, %115 : vector<8x1xf32>
    %c0_70 = arith.constant 0 : index
    %c0_71 = arith.constant 0 : index
    %117 = vector.load %arg24[%c0_70, %c0_71] : memref<8x1xf32, #tpu.memory_space<vmem>>, vector<8x1xf32>
    tpu.vector_store %arg24[%c0_70, %c0_71], %116 {strides = array<i32>} : memref<8x1xf32, #tpu.memory_space<vmem>>, vector<8x1xf32>,
    return
  }
}

</mosaic_0001>

<llo_original>
// kernel: tpu_custom_call.1
$region0: #{tpu_custom_call.1}
  #allocation0 [shape = 'u32[]', space=smem, size = 0x4, offset = 0x4, fixed_abs, tag = 'smem constant byte address 0x4 - core index']
  #allocation1 [shape = 'u32[72,128]{1,0:T(1,128)}', space=vmem, size = 0x9000, scoped, tag = 'internal scratch']
  %s0 = inlined_call_operand.hbm [shape: f32[8,48], index: 0, kind: input, shape index: {}]
  %s1 = inlined_call_operand.hbm [shape: f32[8,16], index: 1, kind: input, shape index: {}]
  %s2 = inlined_call_operand.hbm [shape: f32[8,24], index: 2, kind: input, shape index: {}]
  %s3 = inlined_call_operand.hbm [shape: f32[8,8], index: 3, kind: input, shape index: {}]
  %s4 = inlined_call_operand.hbm [shape: f32[16,32], index: 4, kind: input, shape index: {}]
  %s5 = inlined_call_operand.vmem [shape: f32[1,32], index: 5, kind: input, shape index: {}]
  %s6 = inlined_call_operand.hbm [shape: f32[32,32], index: 6, kind: input, shape index: {}]
  %s7 = inlined_call_operand.hbm [shape: f32[1,32], index: 7, kind: input, shape index: {}]
  %s8 = inlined_call_operand.hbm [shape: f32[1,32], index: 8, kind: input, shape index: {}]
  %s9 = inlined_call_operand.hbm [shape: f32[24,32], index: 9, kind: input, shape index: {}]
  %s10 = inlined_call_operand.hbm [shape: f32[1,32], index: 10, kind: input, shape index: {}]
  %s11 = inlined_call_operand.hbm [shape: f32[32,32], index: 11, kind: input, shape index: {}]
  %s12 = inlined_call_operand.hbm [shape: f32[1,32], index: 12, kind: input, shape index: {}]
  %s13 = inlined_call_operand.hbm [shape: f32[1,32], index: 13, kind: input, shape index: {}]
  %s14 = inlined_call_operand.vmem [shape: f32[8,32], index: 14, kind: input, shape index: {}]
  %s15 = inlined_call_operand.vmem [shape: f32[1,32], index: 15, kind: input, shape index: {}]
  %s16 = inlined_call_operand.hbm [shape: f32[32,32], index: 16, kind: input, shape index: {}]
  %s17 = inlined_call_operand.vmem [shape: f32[1,32], index: 17, kind: input, shape index: {}]
  %s18 = inlined_call_operand.vmem [shape: f32[1,32], index: 18, kind: input, shape index: {}]
  %s19 = inlined_call_operand.hbm [shape: f32[48,64], index: 19, kind: input, shape index: {}]
  %s20 = inlined_call_operand.vmem [shape: f32[1,64], index: 20, kind: input, shape index: {}]
  %s21 = inlined_call_operand.vmem [shape: f32[3,64], index: 21, kind: input, shape index: {}]
  %s22 = inlined_call_operand.vmem [shape: f32[3], index: 22, kind: input, shape index: {}]
  %s23 = inlined_call_operand.vmem [shape: f32[3], index: 23, kind: input, shape index: {}]
  %s24 = inlined_call_operand.vmem [shape: f32[8,1], index: 24, kind: output, shape index: {}]
  %s25 = sld [smem:[#allocation0]]
  $region174: #{tpu_custom_call.1} parent=0
    _
  %s27 = ssub.s32 1, %s25
  %s28 = scalar_select 0, %s27, %s25
  $region1: #{tpu_custom_call.1} parent=0
    #allocation2 [shape = 'u8[4096]{0}', space=vmem, size = 0x1000, scoped, tag = 'input window, operand 0, single buffered']
    #allocation3 [shape = 's32[1]{0}', space=sflag, size = 0x4, scoped, tag = 'scoped memory for tpu_custom_call.1']
    #allocation4 [shape = 's32[1]{0}', space=sflag, size = 0x4, scoped, tag = 'scoped memory for tpu_custom_call.1']
    #allocation5 [shape = 'u8[4096]{0}', space=vmem, size = 0x1000, scoped, tag = 'input window, operand 1, single buffered']
    #allocation6 [shape = 's32[1]{0}', space=sflag, size = 0x4, scoped, tag = 'scoped memory for tpu_custom_call.1']
    #allocation7 [shape = 'u8[4096]{0}', space=vmem, size = 0x1000, scoped, tag = 'input window, operand 2, single buffered']
    #allocation8 [shape = 'u8[4096]{0}', space=vmem, size = 0x1000, scoped, tag = 'input window, operand 3, single buffered']
    #allocation9 [shape = 's32[1]{0}', space=sflag, size = 0x4, scoped, tag = 'scoped memory for tpu_custom_call.1']
    #allocation10 [shape = 'u8[8192]{0}', space=vmem, size = 0x2000, scoped, tag = 'input window, operand 4, single buffered']
    #allocation11 [shape = 'u8[16384]{0}', space=vmem, size = 0x4000, scoped, tag = 'input window, operand 6, single buffered']
    #allocation12 [shape = 's32[1]{0}', space=sflag, size = 0x4, scoped, tag = 'scoped memory for tpu_custom_call.1']
    #allocation13 [shape = 'u8[512]{0}', space=vmem, size = 0x400, scoped, tag = 'input window, operand 7, single buffered']
    #allocation14 [shape = 'u8[512]{0}', space=vmem, size = 0x400, scoped, tag = 'input window, operand 8, single buffered']
    #allocation15 [shape = 's32[1]{0}', space=sflag, size = 0x4, scoped, tag = 'scoped memory for tpu_custom_call.1']
    #allocation16 [shape = 'u8[12288]{0}', space=vmem, size = 0x3000, scoped, tag = 'input window, operand 9, single buffered']
    #allocation17 [shape = 'u8[512]{0}', space=vmem, size = 0x400, scoped, tag = 'input window, operand 10, single buffered']
    #allocation18 [shape = 's32[1]{0}', space=sflag, size = 0x4, scoped, tag = 'scoped memory for tpu_custom_call.1']
    #allocation19 [shape = 'u8[16384]{0}', space=vmem, size = 0x4000, scoped, tag = 'input window, operand 11, single buffered']
    #allocation20 [shape = 'u8[512]{0}', space=vmem, size = 0x400, scoped, tag = 'input window, operand 12, single buffered']
    #allocation21 [shape = 's32[1]{0}', space=sflag, size = 0x4, scoped, tag = 'scoped memory for tpu_custom_call.1']
    #allocation22 [shape = 'u8[512]{0}', space=vmem, size = 0x400, scoped, tag = 'input window, operand 13, single buffered']
    #allocation23 [shape = 'u8[16384]{0}', space=vmem, size = 0x4000, scoped, tag = 'input window, operand 16, single buffered']
    #allocation24 [shape = 's32[1]{0}', space=sflag, size = 0x4, scoped, tag = 'scoped memory for tpu_custom_call.1']
    #allocation25 [shape = 'u8[24576]{0}', space=vmem, size = 0x6000, scoped, tag = 'input window, operand 19, single buffered']
    #allocation26 [shape = 'u8[512]{0}', space=smem, size = 0x200, scoped, tag = 'input window, operand 22, single buffered']
    #allocation27 [shape = 'u8[512]{0}', space=smem, size = 0x200, scoped, tag = 'input window, operand 23, single buffered']
    #allocation28 [shape = 's32[1]{0}', space=sflag, size = 0x4, scoped, tag = 'scoped memory for tpu_custom_call.1']
    %29 = vsyncpa [#allocation3], 0
    %30 = vsyncpa [#allocation6], 0
    %31 = vsyncpa [#allocation9], 0
    %32 = vsyncpa [#allocation12], 0
    %33 = vsyncpa [#allocation15], 0
    %34 = vsyncpa [#allocation18], 0
    %35 = vsyncpa [#allocation21], 0
    %36 = vsyncpa [#allocation24], 0
    %37 = vsyncpa [#allocation4], 0
    %38 = vsyncpa [#allocation28], 0
    // Predicated region
    $region2: #{tpu_custom_call.1} parent=1 // pred_check
      _
    $region3: #{tpu_custom_call.1} parent=1 // pred_check_branch
      %40 = sbr.rel (0) target = $region5
    $region4: #{tpu_custom_call.1} parent=1 // pred_region
      %42 = vsyncadd [#allocation3], 0
      %s44 = sshll.u32 %s0, 4
      %s45 = int_to_ptr.hbm [resolvable:$true] %s44
      %s46 = sshll.u32 [#allocation2], 4
      %s47 = int_to_ptr.vmem [resolvable:$true] %s46
      %49 = dma.hbm_to_vmem [thread:$0]  %s45, 128, %s47, [#allocation3]
    $region5: #{tpu_custom_call.1} parent=1 // pred_fallthru
      _
    // Predicated region
    $region6: #{tpu_custom_call.1} parent=1 // pred_check
      _
    $region7: #{tpu_custom_call.1} parent=1 // pred_check_branch
      %51 = sbr.rel (0) target = $region9
    $region8: #{tpu_custom_call.1} parent=1 // pred_region
      %53 = vsyncadd [#allocation6], 0
      %s55 = sshll.u32 %s1, 4
      %s56 = int_to_ptr.hbm [resolvable:$true] %s55
      %s57 = sshll.u32 [#allocation5], 4
      %s58 = int_to_ptr.vmem [resolvable:$true] %s57
      %60 = dma.hbm_to_vmem [thread:$0]  %s56, 128, %s58, [#allocation6]
    $region9: #{tpu_custom_call.1} parent=1 // pred_fallthru
      _
    // Predicated region
    $region10: #{tpu_custom_call.1} parent=1 // pred_check
      _
    $region11: #{tpu_custom_call.1} parent=1 // pred_check_branch
      %62 = sbr.rel (0) target = $region13
    $region12: #{tpu_custom_call.1} parent=1 // pred_region
      %64 = vsyncadd [#allocation6], 0
      %s66 = sshll.u32 %s2, 4
      %s67 = int_to_ptr.hbm [resolvable:$true] %s66
      %s68 = sshll.u32 [#allocation7], 4
      %s69 = int_to_ptr.vmem [resolvable:$true] %s68
      %71 = dma.hbm_to_vmem [thread:$0]  %s67, 128, %s69, [#allocation6]
    $region13: #{tpu_custom_call.1} parent=1 // pred_fallthru
      _
    // Predicated region
    $region14: #{tpu_custom_call.1} parent=1 // pred_check
      _
    $region15: #{tpu_custom_call.1} parent=1 // pred_check_branch
      %73 = sbr.rel (0) target = $region17
    $region16: #{tpu_custom_call.1} parent=1 // pred_region
      %75 = vsyncadd [#allocation9], 0
      %s77 = sshll.u32 %s3, 4
      %s78 = int_to_ptr.hbm [resolvable:$true] %s77
      %s79 = sshll.u32 [#allocation8], 4
      %s80 = int_to_ptr.vmem [resolvable:$true] %s79
      %82 = dma.hbm_to_vmem [thread:$0]  %s78, 128, %s80, [#allocation9]
    $region17: #{tpu_custom_call.1} parent=1 // pred_fallthru
      _
    // Predicated region
    $region18: #{tpu_custom_call.1} parent=1 // pred_check
      _
    $region19: #{tpu_custom_call.1} parent=1 // pred_check_branch
      %84 = sbr.rel (0) target = $region21
    $region20: #{tpu_custom_call.1} parent=1 // pred_region
      %86 = vsyncadd [#allocation9], 0
      %s87 = sshll.u32 %s4, 4
      %s88 = int_to_ptr.hbm [resolvable:$true] %s87
      %s89 = sshll.u32 [#allocation10], 4
      %s90 = int_to_ptr.vmem [resolvable:$true] %s89
      %95 = dma.hbm_to_vmem [thread:$0]  %s88, 256, %s90, [#allocation9], 128, 128, 8
    $region21: #{tpu_custom_call.1} parent=1 // pred_fallthru
      _
    // Predicated region
    $region22: #{tpu_custom_call.1} parent=1 // pred_check
      _
    $region23: #{tpu_custom_call.1} parent=1 // pred_check_branch
      %97 = sbr.rel (0) target = $region25
    $region24: #{tpu_custom_call.1} parent=1 // pred_region
      _
    $region25: #{tpu_custom_call.1} parent=1 // pred_fallthru
      _
    // Predicated region
    $region26: #{tpu_custom_call.1} parent=1 // pred_check
      _
    $region27: #{tpu_custom_call.1} parent=1 // pred_check_branch
      %99 = sbr.rel (0) target = $region29
    $region28: #{tpu_custom_call.1} parent=1 // pred_region
      %101 = vsyncadd [#allocation12], 0
      %s102 = sshll.u32 %s6, 4
      %s103 = int_to_ptr.hbm [resolvable:$true] %s102
      %s104 = sshll.u32 [#allocation11], 4
      %s105 = int_to_ptr.vmem [resolvable:$true] %s104
      %110 = dma.hbm_to_vmem [thread:$0]  %s103, 512, %s105, [#allocation12], 128, 128, 8
    $region29: #{tpu_custom_call.1} parent=1 // pred_fallthru
      _
    // Predicated region
    $region30: #{tpu_custom_call.1} parent=1 // pred_check
      _
    $region31: #{tpu_custom_call.1} parent=1 // pred_check_branch
      %112 = sbr.rel (0) target = $region33
    $region32: #{tpu_custom_call.1} parent=1 // pred_region
      %114 = vsyncadd [#allocation12], 0
      %s116 = sshll.u32 %s7, 4
      %s117 = int_to_ptr.hbm [resolvable:$true] %s116
      %s118 = sshll.u32 [#allocation13], 4
      %s119 = int_to_ptr.vmem [resolvable:$true] %s118
      %121 = dma.hbm_to_vmem [thread:$0]  %s117, 16, %s119, [#allocation12]
    $region33: #{tpu_custom_call.1} parent=1 // pred_fallthru
      _
    // Predicated region
    $region34: #{tpu_custom_call.1} parent=1 // pred_check
      _
    $region35: #{tpu_custom_call.1} parent=1 // pred_check_branch
      %123 = sbr.rel (0) target = $region37
    $region36: #{tpu_custom_call.1} parent=1 // pred_region
      %125 = vsyncadd [#allocation15], 0
      %s127 = sshll.u32 %s8, 4
      %s128 = int_to_ptr.hbm [resolvable:$true] %s127
      %s129 = sshll.u32 [#allocation14], 4
      %s130 = int_to_ptr.vmem [resolvable:$true] %s129
      %132 = dma.hbm_to_vmem [thread:$0]  %s128, 16, %s130, [#allocation15]
    $region37: #{tpu_custom_call.1} parent=1 // pred_fallthru
      _
    // Predicated region
    $region38: #{tpu_custom_call.1} parent=1 // pred_check
      _
    $region39: #{tpu_custom_call.1} parent=1 // pred_check_branch
      %134 = sbr.rel (0) target = $region41
    $region40: #{tpu_custom_call.1} parent=1 // pred_region
      %136 = vsyncadd [#allocation15], 0
      %s137 = sshll.u32 %s9, 4
      %s138 = int_to_ptr.hbm [resolvable:$true] %s137
      %s139 = sshll.u32 [#allocation16], 4
      %s140 = int_to_ptr.vmem [resolvable:$true] %s139
      %145 = dma.hbm_to_vmem [thread:$0]  %s138, 384, %s140, [#allocation15], 128, 128, 8
    $region41: #{tpu_custom_call.1} parent=1 // pred_fallthru
      _
    // Predicated region
    $region42: #{tpu_custom_call.1} parent=1 // pred_check
      _
    $region43: #{tpu_custom_call.1} parent=1 // pred_check_branch
      %147 = sbr.rel (0) target = $region45
    $region44: #{tpu_custom_call.1} parent=1 // pred_region
      %149 = vsyncadd [#allocation18], 0
      %s151 = sshll.u32 %s10, 4
      %s152 = int_to_ptr.hbm [resolvable:$true] %s151
      %s153 = sshll.u32 [#allocation17], 4
      %s154 = int_to_ptr.vmem [resolvable:$true] %s153
      %156 = dma.hbm_to_vmem [thread:$0]  %s152, 16, %s154, [#allocation18]
    $region45: #{tpu_custom_call.1} parent=1 // pred_fallthru
      _
    // Predicated region
    $region46: #{tpu_custom_call.1} parent=1 // pred_check
      _
    $region47: #{tpu_custom_call.1} parent=1 // pred_check_branch
      %158 = sbr.rel (0) target = $region49
    $region48: #{tpu_custom_call.1} parent=1 // pred_region
      %160 = vsyncadd [#allocation18], 0
      %s161 = sshll.u32 %s11, 4
      %s162 = int_to_ptr.hbm [resolvable:$true] %s161
      %s163 = sshll.u32 [#allocation19], 4
      %s164 = int_to_ptr.vmem [resolvable:$true] %s163
      %169 = dma.hbm_to_vmem [thread:$0]  %s162, 512, %s164, [#allocation18], 128, 128, 8
    $region49: #{tpu_custom_call.1} parent=1 // pred_fallthru
      _
    // Predicated region
    $region50: #{tpu_custom_call.1} parent=1 // pred_check
      _
    $region51: #{tpu_custom_call.1} parent=1 // pred_check_branch
      %171 = sbr.rel (0) target = $region53
    $region52: #{tpu_custom_call.1} parent=1 // pred_region
      %173 = vsyncadd [#allocation21], 0
      %s175 = sshll.u32 %s12, 4
      %s176 = int_to_ptr.hbm [resolvable:$true] %s175
      %s177 = sshll.u32 [#allocation20], 4
      %s178 = int_to_ptr.vmem [resolvable:$true] %s177
      %180 = dma.hbm_to_vmem [thread:$0]  %s176, 16, %s178, [#allocation21]
    $region53: #{tpu_custom_call.1} parent=1 // pred_fallthru
      _
    // Predicated region
    $region54: #{tpu_custom_call.1} parent=1 // pred_check
      _
    $region55: #{tpu_custom_call.1} parent=1 // pred_check_branch
      %182 = sbr.rel (0) target = $region57
    $region56: #{tpu_custom_call.1} parent=1 // pred_region
      %184 = vsyncadd [#allocation21], 0
      %s186 = sshll.u32 %s13, 4
      %s187 = int_to_ptr.hbm [resolvable:$true] %s186
      %s188 = sshll.u32 [#allocation22], 4
      %s189 = int_to_ptr.vmem [resolvable:$true] %s188
      %191 = dma.hbm_to_vmem [thread:$0]  %s187, 16, %s189, [#allocation21]
    $region57: #{tpu_custom_call.1} parent=1 // pred_fallthru
      _
    // Predicated region
    $region58: #{tpu_custom_call.1} parent=1 // pred_check
      _
    $region59: #{tpu_custom_call.1} parent=1 // pred_check_branch
      %193 = sbr.rel (0) target = $region61
    $region60: #{tpu_custom_call.1} parent=1 // pred_region
      _
    $region61: #{tpu_custom_call.1} parent=1 // pred_fallthru
      _
    // Predicated region
    $region62: #{tpu_custom_call.1} parent=1 // pred_check
      _
    $region63: #{tpu_custom_call.1} parent=1 // pred_check_branch
      %195 = sbr.rel (0) target = $region65
    $region64: #{tpu_custom_call.1} parent=1 // pred_region
      _
    $region65: #{tpu_custom_call.1} parent=1 // pred_fallthru
      _
    // Predicated region
    $region66: #{tpu_custom_call.1} parent=1 // pred_check
      _
    $region67: #{tpu_custom_call.1} parent=1 // pred_check_branch
      %197 = sbr.rel (0) target = $region69
    $region68: #{tpu_custom_call.1} parent=1 // pred_region
      %199 = vsyncadd [#allocation24], 0
      %s200 = sshll.u32 %s16, 4
      %s201 = int_to_ptr.hbm [resolvable:$true] %s200
      %s202 = sshll.u32 [#allocation23], 4
      %s203 = int_to_ptr.vmem [resolvable:$true] %s202
      %208 = dma.hbm_to_vmem [thread:$0]  %s201, 512, %s203, [#allocation24], 128, 128, 8
    $region69: #{tpu_custom_call.1} parent=1 // pred_fallthru
      _
    // Predicated region
    $region70: #{tpu_custom_call.1} parent=1 // pred_check
      _
    $region71: #{tpu_custom_call.1} parent=1 // pred_check_branch
      %210 = sbr.rel (0) target = $region73
    $region72: #{tpu_custom_call.1} parent=1 // pred_region
      _
    $region73: #{tpu_custom_call.1} parent=1 // pred_fallthru
      _
    // Predicated region
    $region74: #{tpu_custom_call.1} parent=1 // pred_check
      _
    $region75: #{tpu_custom_call.1} parent=1 // pred_check_branch
      %212 = sbr.rel (0) target = $region77
    $region76: #{tpu_custom_call.1} parent=1 // pred_region
      _
    $region77: #{tpu_custom_call.1} parent=1 // pred_fallthru
      _
    // Predicated region
    $region78: #{tpu_custom_call.1} parent=1 // pred_check
      _
    $region79: #{tpu_custom_call.1} parent=1 // pred_check_branch
      %214 = sbr.rel (0) target = $region81
    $region80: #{tpu_custom_call.1} parent=1 // pred_region
      %216 = vsyncadd [#allocation24], 0
      %s217 = sshll.u32 %s19, 4
      %s218 = int_to_ptr.hbm [resolvable:$true] %s217
      %s219 = sshll.u32 [#allocation25], 4
      %s220 = int_to_ptr.vmem [resolvable:$true] %s219
      %225 = dma.hbm_to_vmem [thread:$0]  %s218, 768, %s220, [#allocation24], 128, 128, 8
    $region81: #{tpu_custom_call.1} parent=1 // pred_fallthru
      _
    // Predicated region
    $region82: #{tpu_custom_call.1} parent=1 // pred_check
      _
    $region83: #{tpu_custom_call.1} parent=1 // pred_check_branch
      %227 = sbr.rel (0) target = $region85
    $region84: #{tpu_custom_call.1} parent=1 // pred_region
      _
    $region85: #{tpu_custom_call.1} parent=1 // pred_fallthru
      _
    // Predicated region
    $region86: #{tpu_custom_call.1} parent=1 // pred_check
      _
    $region87: #{tpu_custom_call.1} parent=1 // pred_check_branch
      %229 = sbr.rel (0) target = $region89
    $region88: #{tpu_custom_call.1} parent=1 // pred_region
      _
    $region89: #{tpu_custom_call.1} parent=1 // pred_fallthru
      _
    // Predicated region
    $region90: #{tpu_custom_call.1} parent=1 // pred_check
      _
    $region91: #{tpu_custom_call.1} parent=1 // pred_check_branch
      %231 = sbr.rel (0) target = $region93
    $region92: #{tpu_custom_call.1} parent=1 // pred_region
      %233 = vsyncadd [#allocation4], 0
      %s235 = sshll.u32 %s22, 4
      %s236 = int_to_ptr.vmem [resolvable:$true] %s235
      %238 = dma.vmem_to_smem %s236, 16, [#allocation26], [#allocation4]
    $region93: #{tpu_custom_call.1} parent=1 // pred_fallthru
      _
    // Predicated region
    $region94: #{tpu_custom_call.1} parent=1 // pred_check
      _
    $region95: #{tpu_custom_call.1} parent=1 // pred_check_branch
      %240 = sbr.rel (0) target = $region97
    $region96: #{tpu_custom_call.1} parent=1 // pred_region
      %242 = vsyncadd [#allocation28], 0
      %s244 = sshll.u32 %s23, 4
      %s245 = int_to_ptr.vmem [resolvable:$true] %s244
      %247 = dma.vmem_to_smem %s245, 16, [#allocation27], [#allocation28]
    $region97: #{tpu_custom_call.1} parent=1 // pred_fallthru
      _
    // Predicated region
    $region98: #{tpu_custom_call.1} parent=1 // pred_check
      _
    $region99: #{tpu_custom_call.1} parent=1 // pred_check_branch
      %249 = sbr.rel (0) target = $region101
    $region100: #{tpu_custom_call.1} parent=1 // pred_region
      %251 = dma.done [#allocation3], 128
    $region101: #{tpu_custom_call.1} parent=1 // pred_fallthru
      _
    // Predicated region
    $region102: #{tpu_custom_call.1} parent=1 // pred_check
      _
    $region103: #{tpu_custom_call.1} parent=1 // pred_check_branch
      %253 = sbr.rel (0) target = $region105
    $region104: #{tpu_custom_call.1} parent=1 // pred_region
      %255 = dma.done [#allocation6], 128
    $region105: #{tpu_custom_call.1} parent=1 // pred_fallthru
      _
    // Predicated region
    $region106: #{tpu_custom_call.1} parent=1 // pred_check
      _
    $region107: #{tpu_custom_call.1} parent=1 // pred_check_branch
      %257 = sbr.rel (0) target = $region109
    $region108: #{tpu_custom_call.1} parent=1 // pred_region
      %259 = dma.done [#allocation6], 128
    $region109: #{tpu_custom_call.1} parent=1 // pred_fallthru
      _
    // Predicated region
    $region110: #{tpu_custom_call.1} parent=1 // pred_check
      _
    $region111: #{tpu_custom_call.1} parent=1 // pred_check_branch
      %261 = sbr.rel (0) target = $region113
    $region112: #{tpu_custom_call.1} parent=1 // pred_region
      %263 = dma.done [#allocation9], 128
    $region113: #{tpu_custom_call.1} parent=1 // pred_fallthru
      _
    // Predicated region
    $region114: #{tpu_custom_call.1} parent=1 // pred_check
      _
    $region115: #{tpu_custom_call.1} parent=1 // pred_check_branch
      %265 = sbr.rel (0) target = $region117
    $region116: #{tpu_custom_call.1} parent=1 // pred_region
      %267 = dma.done [#allocation9], 256
    $region117: #{tpu_custom_call.1} parent=1 // pred_fallthru
      _
    // Predicated region
    $region118: #{tpu_custom_call.1} parent=1 // pred_check
      _
    $region119: #{tpu_custom_call.1} parent=1 // pred_check_branch
      %269 = sbr.rel (0) target = $region121
    $region120: #{tpu_custom_call.1} parent=1 // pred_region
      %271 = dma.done [#allocation12], 512
    $region121: #{tpu_custom_call.1} parent=1 // pred_fallthru
      _
    // Predicated region
    $region122: #{tpu_custom_call.1} parent=1 // pred_check
      _
    $region123: #{tpu_custom_call.1} parent=1 // pred_check_branch
      %273 = sbr.rel (0) target = $region125
    $region124: #{tpu_custom_call.1} parent=1 // pred_region
      %275 = dma.done [#allocation12], 16
    $region125: #{tpu_custom_call.1} parent=1 // pred_fallthru
      _
    // Predicated region
    $region126: #{tpu_custom_call.1} parent=1 // pred_check
      _
    $region127: #{tpu_custom_call.1} parent=1 // pred_check_branch
      %277 = sbr.rel (0) target = $region129
    $region128: #{tpu_custom_call.1} parent=1 // pred_region
      %279 = dma.done [#allocation15], 16
    $region129: #{tpu_custom_call.1} parent=1 // pred_fallthru
      _
    // Predicated region
    $region130: #{tpu_custom_call.1} parent=1 // pred_check
      _
    $region131: #{tpu_custom_call.1} parent=1 // pred_check_branch
      %281 = sbr.rel (0) target = $region133
    $region132: #{tpu_custom_call.1} parent=1 // pred_region
      %283 = dma.done [#allocation15], 384
    $region133: #{tpu_custom_call.1} parent=1 // pred_fallthru
      _
    // Predicated region
    $region134: #{tpu_custom_call.1} parent=1 // pred_check
      _
    $region135: #{tpu_custom_call.1} parent=1 // pred_check_branch
      %285 = sbr.rel (0) target = $region137
    $region136: #{tpu_custom_call.1} parent=1 // pred_region
      %287 = dma.done [#allocation18], 16
    $region137: #{tpu_custom_call.1} parent=1 // pred_fallthru
      _
    // Predicated region
    $region138: #{tpu_custom_call.1} parent=1 // pred_check
      _
    $region139: #{tpu_custom_call.1} parent=1 // pred_check_branch
      %289 = sbr.rel (0) target = $region141
    $region140: #{tpu_custom_call.1} parent=1 // pred_region
      %291 = dma.done [#allocation18], 512
    $region141: #{tpu_custom_call.1} parent=1 // pred_fallthru
      _
    // Predicated region
    $region142: #{tpu_custom_call.1} parent=1 // pred_check
      _
    $region143: #{tpu_custom_call.1} parent=1 // pred_check_branch
      %293 = sbr.rel (0) target = $region145
    $region144: #{tpu_custom_call.1} parent=1 // pred_region
      %295 = dma.done [#allocation21], 16
    $region145: #{tpu_custom_call.1} parent=1 // pred_fallthru
      _
    // Predicated region
    $region146: #{tpu_custom_call.1} parent=1 // pred_check
      _
    $region147: #{tpu_custom_call.1} parent=1 // pred_check_branch
      %297 = sbr.rel (0) target = $region149
    $region148: #{tpu_custom_call.1} parent=1 // pred_region
      %299 = dma.done [#allocation21], 16
    $region149: #{tpu_custom_call.1} parent=1 // pred_fallthru
      _
    // Predicated region
    $region150: #{tpu_custom_call.1} parent=1 // pred_check
      _
    $region151: #{tpu_custom_call.1} parent=1 // pred_check_branch
      %301 = sbr.rel (0) target = $region153
    $region152: #{tpu_custom_call.1} parent=1 // pred_region
      %303 = dma.done [#allocation24], 512
    $region153: #{tpu_custom_call.1} parent=1 // pred_fallthru
      _
    // Predicated region
    $region154: #{tpu_custom_call.1} parent=1 // pred_check
      _
    $region155: #{tpu_custom_call.1} parent=1 // pred_check_branch
      %305 = sbr.rel (0) target = $region157
    $region156: #{tpu_custom_call.1} parent=1 // pred_region
      %307 = dma.done [#allocation24], 768
    $region157: #{tpu_custom_call.1} parent=1 // pred_fallthru
      _
    // Predicated region
    $region158: #{tpu_custom_call.1} parent=1 // pred_check
      _
    $region159: #{tpu_custom_call.1} parent=1 // pred_check_branch
      %309 = sbr.rel (0) target = $region161
    $region160: #{tpu_custom_call.1} parent=1 // pred_region
      %311 = dma.done [#allocation4], 16
    $region161: #{tpu_custom_call.1} parent=1 // pred_fallthru
      _
    // Predicated region
    $region162: #{tpu_custom_call.1} parent=1 // pred_check
      _
    $region163: #{tpu_custom_call.1} parent=1 // pred_check_branch
      %313 = sbr.rel (0) target = $region165
    $region164: #{tpu_custom_call.1} parent=1 // pred_region
      %315 = dma.done [#allocation28], 16
    $region165: #{tpu_custom_call.1} parent=1 // pred_fallthru
      _
    %316 = sfence
    %s317 = sld [smem:[#allocation26]]
    %v318 = vld [vmem:[#allocation5] sm:$0xff]
    %v319 = vld [vmem:[#allocation10] sm:$0xff]
    %v320 = vld [vmem:[#allocation10 + $0x8] sm:$0xff]
    %v321 = vld [vmem:[%s5] sm:$0x1]
    %v323 = vperm.slane %v321, 0
    %vm325 = vcmask 130048
    %v327 = vsel %vm325, %v318, 0
    %329 = vmatpush.msra.mxu0 0.0
    %330 = vmatpush.msra.mxu0 0.0
    %331 = vmatpush.msra.mxu0 0.0
    %332 = vmatpush.msra.mxu0 0.0
    %333 = vmatpush.msra.mxu0 0.0
    %334 = vmatpush.msra.mxu0 0.0
    %335 = vmatpush.msra.mxu0 0.0
    %336 = vmatpush.msra.mxu0 0.0
    %337 = vmatpush.msra.mxu0 0.0
    %338 = vmatpush.msra.mxu0 0.0
    %339 = vmatpush.msra.mxu0 0.0
    %340 = vmatpush.msra.mxu0 0.0
    %341 = vmatpush.msra.mxu0 0.0
    %342 = vmatpush.msra.mxu0 0.0
    %343 = vmatpush.msra.mxu0 %v320
    %344 = vmatpush.msra.mxu0 %v319
    %345 = vmatmul.f32.gmra.mxu0 %v327
    %v346 = vpop.f32.mrf.mxu0
    %v347 = vadd.f32 %v323, %v346
    %348 = vdwg.mxu0
    %v349 = vmax.f32 %v347, 0.0
    %v350 = vld [vmem:[#allocation11] sm:$0xff]
    %v351 = vld [vmem:[#allocation11 + $0x8] sm:$0xff]
    %v352 = vld [vmem:[#allocation11 + $0x10] sm:$0xff]
    %v353 = vld [vmem:[#allocation11 + $0x18] sm:$0xff]
    %v354 = vld [vmem:[#allocation13] sm:$0x1]
    %v356 = vperm.slane %v354, 0
    %vm358 = vcmask 261120
    %v360 = vsel %vm358, %v349, 0
    %362 = vmatpush.msra.mxu0 0.0
    %363 = vmatpush.msra.mxu0 0.0
    %364 = vmatpush.msra.mxu0 0.0
    %365 = vmatpush.msra.mxu0 0.0
    %366 = vmatpush.msra.mxu0 0.0
    %367 = vmatpush.msra.mxu0 0.0
    %368 = vmatpush.msra.mxu0 0.0
    %369 = vmatpush.msra.mxu0 0.0
    %370 = vmatpush.msra.mxu0 0.0
    %371 = vmatpush.msra.mxu0 0.0
    %372 = vmatpush.msra.mxu0 0.0
    %373 = vmatpush.msra.mxu0 0.0
    %374 = vmatpush.msra.mxu0 %v353
    %375 = vmatpush.msra.mxu0 %v352
    %376 = vmatpush.msra.mxu0 %v351
    %377 = vmatpush.msra.mxu0 %v350
    %378 = vmatmul.f32.gmra.mxu0 %v360
    %v379 = vpop.f32.mrf.mxu0
    %v380 = vadd.f32 %v356, %v379
    %381 = vdwg.mxu0
    %v382 = vmax.f32 %v380, 0.0
    %v383 = vld [vmem:[#allocation14] sm:$0x1]
    %v385 = vperm.slane %v383, 0
    %v387 = vmul.f32 %v382, %v385
    %v388 = vsel %vm358, %v387, 0.0
    %389 = vadd.xlane.f32.xlu0 %v388
    %v390 = vpop.xlane.xlu0 %389
    %v391 = vstv %s317
    %v392 = vadd.f32 %v390, %v391
    %s393 = sld [smem:[#allocation26 + $0x1]]
    %v394 = vld [vmem:[#allocation7] sm:$0xff]
    %v395 = vld [vmem:[#allocation16] sm:$0xff]
    %v396 = vld [vmem:[#allocation16 + $0x8] sm:$0xff]
    %v397 = vld [vmem:[#allocation16 + $0x10] sm:$0xff]
    %v398 = vld [vmem:[#allocation17] sm:$0x1]
    %v400 = vperm.slane %v398, 0
    %vm402 = vcmask 195584
    %v404 = vsel %vm402, %v394, 0
    %406 = vmatpush.msra.mxu0 0.0
    %407 = vmatpush.msra.mxu0 0.0
    %408 = vmatpush.msra.mxu0 0.0
    %409 = vmatpush.msra.mxu0 0.0
    %410 = vmatpush.msra.mxu0 0.0
    %411 = vmatpush.msra.mxu0 0.0
    %412 = vmatpush.msra.mxu0 0.0
    %413 = vmatpush.msra.mxu0 0.0
    %414 = vmatpush.msra.mxu0 0.0
    %415 = vmatpush.msra.mxu0 0.0
    %416 = vmatpush.msra.mxu0 0.0
    %417 = vmatpush.msra.mxu0 0.0
    %418 = vmatpush.msra.mxu0 0.0
    %419 = vmatpush.msra.mxu0 %v397
    %420 = vmatpush.msra.mxu0 %v396
    %421 = vmatpush.msra.mxu0 %v395
    %422 = vmatmul.f32.gmra.mxu0 %v404
    %v423 = vpop.f32.mrf.mxu0
    %v424 = vadd.f32 %v400, %v423
    %425 = vdwg.mxu0
    %v426 = vmax.f32 %v424, 0.0
    %v427 = vld [vmem:[#allocation19] sm:$0xff]
    %v428 = vld [vmem:[#allocation19 + $0x8] sm:$0xff]
    %v429 = vld [vmem:[#allocation19 + $0x10] sm:$0xff]
    %v430 = vld [vmem:[#allocation19 + $0x18] sm:$0xff]
    %v431 = vld [vmem:[#allocation20] sm:$0x1]
    %v433 = vperm.slane %v431, 0
    %v436 = vsel %vm358, %v426, 0
    %438 = vmatpush.msra.mxu0 0.0
    %439 = vmatpush.msra.mxu0 0.0
    %440 = vmatpush.msra.mxu0 0.0
    %441 = vmatpush.msra.mxu0 0.0
    %442 = vmatpush.msra.mxu0 0.0
    %443 = vmatpush.msra.mxu0 0.0
    %444 = vmatpush.msra.mxu0 0.0
    %445 = vmatpush.msra.mxu0 0.0
    %446 = vmatpush.msra.mxu0 0.0
    %447 = vmatpush.msra.mxu0 0.0
    %448 = vmatpush.msra.mxu0 0.0
    %449 = vmatpush.msra.mxu0 0.0
    %450 = vmatpush.msra.mxu0 %v430
    %451 = vmatpush.msra.mxu0 %v429
    %452 = vmatpush.msra.mxu0 %v428
    %453 = vmatpush.msra.mxu0 %v427
    %454 = vmatmul.f32.gmra.mxu0 %v436
    %v455 = vpop.f32.mrf.mxu0
    %v456 = vadd.f32 %v433, %v455
    %457 = vdwg.mxu0
    %v458 = vmax.f32 %v456, 0.0
    %v459 = vld [vmem:[#allocation22] sm:$0x1]
    %v461 = vperm.slane %v459, 0
    %v463 = vmul.f32 %v458, %v461
    %v464 = vsel %vm358, %v463, 0.0
    %465 = vadd.xlane.f32.xlu0 %v464
    %v466 = vpop.xlane.xlu0 %465
    %v467 = vstv %s393
    %v468 = vadd.f32 %v466, %v467
    %s469 = sld [smem:[#allocation26 + $0x2]]
    %v470 = vld [vmem:[#allocation8] sm:$0xff]
    %v471 = vld [vmem:[%s14] sm:$0xff]
    %v472 = vld [vmem:[%s15] sm:$0x1]
    %v474 = vperm.slane %v472, 0
    %vm476 = vcmask 64512
    %v478 = vsel %vm476, %v470, 0
    %480 = vmatpush.msra.mxu0 0.0
    %481 = vmatpush.msra.mxu0 0.0
    %482 = vmatpush.msra.mxu0 0.0
    %483 = vmatpush.msra.mxu0 0.0
    %484 = vmatpush.msra.mxu0 0.0
    %485 = vmatpush.msra.mxu0 0.0
    %486 = vmatpush.msra.mxu0 0.0
    %487 = vmatpush.msra.mxu0 0.0
    %488 = vmatpush.msra.mxu0 0.0
    %489 = vmatpush.msra.mxu0 0.0
    %490 = vmatpush.msra.mxu0 0.0
    %491 = vmatpush.msra.mxu0 0.0
    %492 = vmatpush.msra.mxu0 0.0
    %493 = vmatpush.msra.mxu0 0.0
    %494 = vmatpush.msra.mxu0 0.0
    %495 = vmatpush.msra.mxu0 %v471
    %496 = vmatmul.f32.gmra.mxu0 %v478
    %v497 = vpop.f32.mrf.mxu0
    %v498 = vadd.f32 %v474, %v497
    %499 = vdwg.mxu0
    %v500 = vmax.f32 %v498, 0.0
    %v501 = vld [vmem:[#allocation23] sm:$0xff]
    %v502 = vld [vmem:[#allocation23 + $0x8] sm:$0xff]
    %v503 = vld [vmem:[#allocation23 + $0x10] sm:$0xff]
    %v504 = vld [vmem:[#allocation23 + $0x18] sm:$0xff]
    %v505 = vld [vmem:[%s17] sm:$0x1]
    %v507 = vperm.slane %v505, 0
    %v510 = vsel %vm358, %v500, 0
    %512 = vmatpush.msra.mxu0 0.0
    %513 = vmatpush.msra.mxu0 0.0
    %514 = vmatpush.msra.mxu0 0.0
    %515 = vmatpush.msra.mxu0 0.0
    %516 = vmatpush.msra.mxu0 0.0
    %517 = vmatpush.msra.mxu0 0.0
    %518 = vmatpush.msra.mxu0 0.0
    %519 = vmatpush.msra.mxu0 0.0
    %520 = vmatpush.msra.mxu0 0.0
    %521 = vmatpush.msra.mxu0 0.0
    %522 = vmatpush.msra.mxu0 0.0
    %523 = vmatpush.msra.mxu0 0.0
    %524 = vmatpush.msra.mxu0 %v504
    %525 = vmatpush.msra.mxu0 %v503
    %526 = vmatpush.msra.mxu0 %v502
    %527 = vmatpush.msra.mxu0 %v501
    %528 = vmatmul.f32.gmra.mxu0 %v510
    %v529 = vpop.f32.mrf.mxu0
    %v530 = vadd.f32 %v507, %v529
    %531 = vdwg.mxu0
    %v532 = vmax.f32 %v530, 0.0
    %v533 = vld [vmem:[%s18] sm:$0x1]
    %v535 = vperm.slane %v533, 0
    %v537 = vmul.f32 %v532, %v535
    %v538 = vsel %vm358, %v537, 0.0
    %539 = vadd.xlane.f32.xlu0 %v538
    %v540 = vpop.xlane.xlu0 %539
    %v541 = vstv %s469
    %v542 = vadd.f32 %v540, %v541
    %v543 = vld [vmem:[#allocation2] sm:$0xff]
    %v544 = vld [vmem:[#allocation25] sm:$0xff]
    %v545 = vld [vmem:[#allocation25 + $0x8] sm:$0xff]
    %v546 = vld [vmem:[#allocation25 + $0x10] sm:$0xff]
    %v547 = vld [vmem:[#allocation25 + $0x18] sm:$0xff]
    %v548 = vld [vmem:[#allocation25 + $0x20] sm:$0xff]
    %v549 = vld [vmem:[#allocation25 + $0x28] sm:$0xff]
    %v550 = vld [vmem:[%s20] sm:$0x1]
    %v552 = vperm.slane %v550, 0
    %vm554 = vcmask 392192
    %v556 = vsel %vm554, %v543, 0
    %558 = vmatpush.msra.mxu0 0.0
    %559 = vmatpush.msra.mxu0 0.0
    %560 = vmatpush.msra.mxu0 0.0
    %561 = vmatpush.msra.mxu0 0.0
    %562 = vmatpush.msra.mxu0 0.0
    %563 = vmatpush.msra.mxu0 0.0
    %564 = vmatpush.msra.mxu0 0.0
    %565 = vmatpush.msra.mxu0 0.0
    %566 = vmatpush.msra.mxu0 0.0
    %567 = vmatpush.msra.mxu0 0.0
    %568 = vmatpush.msra.mxu0 %v549
    %569 = vmatpush.msra.mxu0 %v548
    %570 = vmatpush.msra.mxu0 %v547
    %571 = vmatpush.msra.mxu0 %v546
    %572 = vmatpush.msra.mxu0 %v545
    %573 = vmatpush.msra.mxu0 %v544
    %574 = vmatmul.f32.gmra.mxu0 %v556
    %v575 = vpop.f32.mrf.mxu0
    %v576 = vadd.f32 %v552, %v575
    %577 = vdwg.mxu0
    %v578 = vmax.f32 %v576, 0.0
    %v579 = vld [vmem:[%s21] sm:$0x1]
    %v580 = vperm.slane %v579, 0
    %v581 = vmul.f32 %v578, %v580
    %vm582 = vcmask 523264
    %v583 = vsel %vm582, %v581, 0.0
    %584 = vadd.xlane.f32.xlu0 %v583
    %v585 = vpop.xlane.xlu0 %584
    %s586 = sld [smem:[#allocation27]]
    %v587 = vstv %s586
    %v588 = vadd.f32 %v585, %v587
    %v589 = vld [vmem:[%s21 + $0x1] sm:$0x1]
    %v590 = vperm.slane %v589, 0
    %v591 = vmul.f32 %v578, %v590
    %v592 = vsel %vm582, %v591, 0.0
    %593 = vadd.xlane.f32.xlu0 %v592
    %v594 = vpop.xlane.xlu0 %593
    %s595 = sld [smem:[#allocation27 + $0x1]]
    %v596 = vstv %s595
    %v597 = vadd.f32 %v594, %v596
    %v598 = vld [vmem:[%s21 + $0x2] sm:$0x1]
    %v599 = vperm.slane %v598, 0
    %v600 = vmul.f32 %v578, %v599
    %v601 = vsel %vm582, %v600, 0.0
    %602 = vadd.xlane.f32.xlu0 %v601
    %v603 = vpop.xlane.xlu0 %602
    %s604 = sld [smem:[#allocation27 + $0x2]]
    %v605 = vstv %s604
    %v606 = vadd.f32 %v603, %v605
    %v607 = vmax.f32 %v588, %v597
    %v608 = vmax.f32 %v607, %v606
    %v609 = vsub.f32 %v588, %v608
    %v610 = vmul.f32 %v609, 1.442695
    %v611 = vpow.pop %v610
    %v612 = vsub.f32 %v597, %v608
    %v613 = vmul.f32 %v612, 1.442695
    %v614 = vpow.pop %v613
    %v615 = vsub.f32 %v606, %v608
    %v616 = vmul.f32 %v615, 1.442695
    %v617 = vpow.pop %v616
    %v618 = vmul.f32 %v392, %v611
    %v619 = vmul.f32 %v468, %v614
    %v620 = vadd.f32 %v618, %v619
    %v621 = vmul.f32 %v542, %v617
    %v622 = vadd.f32 %v620, %v621
    %v623 = vadd.f32 %v611, %v614
    %v624 = vadd.f32 %v623, %v617
    %v625 = vrcp.pop %v624
    %v626 = vmul.f32 %v624, %v625
    %v627 = vsub.f32 1.0, %v626
    %v628 = vmul.f32 %v625, %v627
    %v629 = vadd.f32 %v625, %v628
    %vm630 = vweird.f32 %v624
    %vm631 = vweird.f32 %v625
    %vm632 = vmor %vm630, %vm631
    %v633 = vsel %vm632, %v625, %v629
    %v634 = vand.u32 2147483647, %v624
    %vm635 = vcmp.eq.f32.partialorder %v634, 8.507059e+37
    %v636 = vand.u32 %v624, 2147483648
    %v637 = vor.u32 1.1754944e-38, %v636
    %v638 = vsel %vm635, %v637, %v633
    %v639 = vmul.f32 %v622, %v638
    %vm640 = vcmask 7168
    %641 = vst.msk [vmem:[%s24] sm:$0xff] %vm640, %v639
    // Predicated region
    $region166: #{tpu_custom_call.1} parent=1 // pred_check
      _
    $region167: #{tpu_custom_call.1} parent=1 // pred_check_branch
      %643 = sbr.rel (0) target = $region169
    $region168: #{tpu_custom_call.1} parent=1 // pred_region
      _
    $region169: #{tpu_custom_call.1} parent=1 // pred_fallthru
      _
    // Predicated region
    $region170: #{tpu_custom_call.1} parent=1 // pred_check
      _
    $region171: #{tpu_custom_call.1} parent=1 // pred_check_branch
      %645 = sbr.rel (0) target = $region173
    $region172: #{tpu_custom_call.1} parent=1 // pred_region
      _
    $region173: #{tpu_custom_call.1} parent=1 // pred_fallthru
      _
    %646 = vsyncpa [#allocation3], 1
    %647 = vsyncpa [#allocation6], 1
    %648 = vsyncpa [#allocation9], 1
    %649 = vsyncpa [#allocation12], 1
    %650 = vsyncpa [#allocation15], 1
    %651 = vsyncpa [#allocation18], 1
    %652 = vsyncpa [#allocation21], 1
    %653 = vsyncpa [#allocation24], 1
    %654 = vsyncpa [#allocation4], 1
    %655 = vsyncpa [#allocation28], 1

</llo_original>
